<compile_context>
chip_gen: v7x
topology: tpu7x:2x2x1
jax: 0.10.0
libtpu: 0.0.40
codegen_flags: <defaults>
</compile_context>

<pallas_src>
import functools
import math

import numpy as np
import jax
import jax.numpy as jnp
from jax import lax
from jax.experimental import pallas as pl
from jax.experimental.pallas import tpu as pltpu


def _float_embedding_sine_kernel(c0_ref, phs_ref, x_ref, o_ref, *, x_is_scalar):
    """y = x_sel * (scale/dim_t) + phase; out = sin(y).  One transcendental/elem."""
    phs = phs_ref[...]                                   # (1, Lw) f32, VMEM resident
    if x_is_scalar:
        # x_ref: (bn, Kc) packed per-row scalars (zero padded to Kc sublanes).
        # c0_ref: (Kc, Lw) one-hot selection matrix pre-scaled by scale/dim_t.
        # The select + coef multiply run on the idle MXU instead of the VPU.
        arg = jnp.dot(x_ref[...], c0_ref[...],
                      preferred_element_type=jnp.float32,
                      precision=lax.Precision.HIGHEST) + phs
    else:
        # x_ref: (bn, Lw).  Duplicate even feature columns into odd lanes:
        # XLU roll + one vsel using the phase-derived parity mask (no iota/mod).
        xv = x_ref[...].astype(jnp.float32)
        rolled = pltpu.roll(xv, shift=1, axis=1)          # lane j <- lane j-1
        x_dup = jnp.where(phs > 0.0, rolled, xv)          # odd lanes take even neighbour
        arg = x_dup * c0_ref[...] + phs
    # sin on even lanes, sin(t + pi/2) == cos(t) on odd lanes.
    o_ref[...] = jnp.sin(arg).astype(o_ref.dtype)


def float_embedding_sine(x, *, num_pos_feats=512, temperature=10000.0,
                         scale=None, out_dtype=None):
    """Pallas equivalent of FloatEmbeddingSine.forward.

    x: (N, K) float, K == 1 or K == num_pos_feats (same broadcast rule as PyTorch).
    Returns: (N, num_pos_feats) in x.dtype (or out_dtype if given).
    """
    if scale is None:
        scale = 2.0 * math.pi
    scale = float(scale)
    temperature = float(temperature)
    F = int(num_pos_feats)
    if F % 2 != 0:
        raise ValueError("num_pos_feats must be even")
    N, K = x.shape
    if K not in (1, F):
        raise ValueError("x must be (N, 1) or (N, num_pos_feats)")
    out_dtype = x.dtype if out_dtype is None else jnp.dtype(out_dtype)

    # ---- lane packing: output last dim is always a multiple of 128 (full-lane vst) ----
    if F % 128 == 0:
        pack, Lw = 1, F
    elif 128 % F == 0:
        pack, Lw = 128 // F, 128
    else:
        pack, Lw = 1, ((F + 127) // 128) * 128       # pad lanes; sliced off at the end

    x_is_scalar = (K == 1)

    # Pad rows to a multiple of `pack` and fold `pack` rows into each kernel row.
    N_pad = ((N + pack - 1) // pack) * pack
    x_p = jnp.pad(x, ((0, N_pad - N), (0, 0))) if N_pad != N else x
    Np = N_pad // pack

    # ---- host-precomputed per-lane constants (row-invariant, VMEM resident) ----
    lane = np.arange(Lw)
    g = lane // F                                    # packed original row for this lane
    f = lane % F                                     # feature index within that row
    valid = lane < pack * F                          # False only for awkward-F lane pad
    inv_dim = scale / np.power(temperature, 2.0 * (f // 2) / F)
    coef_np = np.where(valid, inv_dim, 0.0).astype(np.float32)
    phase_np = np.where(valid, (f % 2) * (math.pi / 2.0), 0.0).astype(np.float32)
    phs = jnp.asarray(phase_np).reshape(1, Lw)

    if x_is_scalar:
        # One-hot selection matrix pre-scaled by scale/dim_t, contraction padded to a
        # sublane multiple so the MXU matmul shapes stay regular.
        Kc = max(8, ((pack + 7) // 8) * 8)
        B = np.zeros((Kc, Lw), np.float32)
        B[g, lane] = coef_np
        c0 = jnp.asarray(B)
        x_in = x_p.reshape(Np, pack).astype(jnp.float32)
        if Kc > pack:
            x_in = jnp.pad(x_in, ((0, 0), (0, Kc - pack)))
    else:
        c0 = jnp.asarray(coef_np).reshape(1, Lw)
        x_in = x_p.reshape(Np, pack * F)
        if Lw > pack * F:
            x_in = jnp.pad(x_in, ((0, 0), (0, Lw - pack * F)))
    Kin = x_in.shape[1]

    # ---- row-tile sizing ----
    out_bytes = jnp.dtype(out_dtype).itemsize
    in_bytes = jnp.dtype(x_in.dtype).itemsize
    align = 32 // min(out_bytes, in_bytes, 4)        # 8 for f32, 16 for bf16/f16
    target_rows = max(align, (2 * 1024 * 1024) // Lw)            # ~2M out elems / tile
    bytes_per_row = (Kin * in_bytes + Lw * out_bytes) * 2        # double-buffered in+out
    vmem_rows = max(align, (16 * 1024 * 1024) // bytes_per_row)  # <=16 MiB (v7x-safe)
    bn = min(target_rows, vmem_rows)
    if Np >= 2 * align:
        # Keep >= 2 grid steps so both v7x TensorCores get work (no-op on v5e/v6e).
        bn = min(bn, (Np // 2 // align) * align)
    if bn >= Np:
        bn = Np                                       # full dim -> (8,128) rule satisfied
    else:
        bn = max(align, (bn // align) * align)        # sublane-aligned tiles
    grid = (pl.cdiv(Np, bn),)

    kernel = functools.partial(_float_embedding_sine_kernel, x_is_scalar=x_is_scalar)

    out_packed = pl.pallas_call(
        kernel,
        out_shape=jax.ShapeDtypeStruct((Np, Lw), out_dtype),
        grid_spec=pltpu.PrefetchScalarGridSpec(
            num_scalar_prefetch=0,
            grid=grid,
            in_specs=[
                pl.BlockSpec(tuple(c0.shape), lambda i: (0, 0)),  # B / coef (resident)
                pl.BlockSpec((1, Lw), lambda i: (0, 0)),          # phase    (resident)
                pl.BlockSpec((bn, Kin), lambda i: (i, 0)),        # x rows
            ],
            out_specs=pl.BlockSpec((bn, Lw), lambda i: (i, 0)),
        ),
        compiler_params=pltpu.CompilerParams(
            dimension_semantics=("parallel",),
            vmem_limit_bytes=32 * 1024 * 1024,
        ),
    )(c0, phs, x_in)

    out = out_packed
    if pack > 1:
        out = out.reshape(N_pad, F)        # free row-major view
    elif Lw > F:
        out = out[:, :F]                   # drop awkward-F lane padding
    if N_pad != N:
        out = out[:N]
    return out


def _reference(x, num_pos_feats, temperature, scale):
    """Pure-JAX transcription of the PyTorch forward for verification."""
    x = x * scale
    dim_t = jnp.arange(num_pos_feats, dtype=jnp.float32)
    dim_t = temperature ** (2.0 * jnp.floor(dim_t / 2.0) / num_pos_feats)
    x = x / dim_t
    out = jnp.stack([jnp.sin(x[:, 0::2]), jnp.cos(x[:, 0::2])], axis=-1)
    return out.reshape(x.shape[0], -1)


if __name__ == "__main__":
    key = jax.random.PRNGKey(0)
    ks = jax.random.split(key, 6)
    temperature = 10000.0
    scale = 2.0 * math.pi

    def check(x, F, out_dtype=None, atol=1e-4):
        out = jax.block_until_ready(
            float_embedding_sine(x, num_pos_feats=F, temperature=temperature,
                                 scale=scale, out_dtype=out_dtype))
        ref = _reference(x.astype(jnp.float32), F, temperature, scale)
        assert out.shape == (x.shape[0], F), (out.shape, F)
        err = float(jnp.max(jnp.abs(out.astype(jnp.float32) - ref)))
        assert err <= atol, (tuple(x.shape), F, err)

    # K == 1, F = 64 -> lane-packed (pack=2), MXU one-hot matmul path, single tile.
    check(jax.random.normal(ks[0], (8, 1), jnp.float32), 64)
    # K == F = 128 -> XLU roll + parity-select duplication path.
    check(jax.random.normal(ks[1], (6, 128), jnp.float32), 128)
    # Odd N exercises row padding needed for lane packing.
    check(jax.random.normal(ks[2], (7, 1), jnp.float32), 64)
    # Larger N exercises the multi-step grid (>= 2 steps for v7x megacore).
    check(jax.random.normal(ks[3], (512, 1), jnp.float32), 64)
    # Awkward F (neither divisor nor multiple of 128): lane padding + partial last tile.
    check(jax.random.normal(ks[4], (300, 96), jnp.float32), 96)
    # bf16 output (v5e memory-bandwidth lever); row tiles aligned to 16 sublanes.
    check(jax.random.normal(ks[5], (64, 1), jnp.float32), 64,
          out_dtype=jnp.bfloat16, atol=1e-2)

    print("KERNEL_OK")
</pallas_src>

<mosaic_0001>
module attributes {stable_mosaic.version = 11 : i64} {
  func.func @_float_embedding_sine_kernel(%arg0: i32, %arg1: memref<8x128xf32, #tpu.memory_space<vmem>>, %arg2: memref<1x128xf32, #tpu.memory_space<vmem>>, %arg3: memref<4x8xf32, #tpu.memory_space<vmem>>, %arg4: memref<4x128xf32, #tpu.memory_space<vmem>>) attributes {dimension_semantics = [#tpu.dimension_semantics<parallel>], iteration_bounds = array<i64: 1>, scalar_prefetch = 0 : i64, scratch_operands = 0 : i64, tpu.core_type = #tpu.core_type<tc>, window_params = [{pipeline_mode = #tpu.pipeline_mode<synchronous>, transform_indices = @transform_0, window_bounds = array<i64: 8, 128>}, {pipeline_mode = #tpu.pipeline_mode<synchronous>, transform_indices = @transform_1, window_bounds = array<i64: 1, 128>}, {transform_indices = @transform_2, window_bounds = array<i64: 4, 8>}, {transform_indices = @transform_3, window_bounds = array<i64: 4, 128>}]} {
    %c0 = arith.constant 0 : index
    %c0_0 = arith.constant 0 : index
    %0 = vector.load %arg2[%c0, %c0_0] : memref<1x128xf32, #tpu.memory_space<vmem>>, vector<1x128xf32>
    %c0_1 = arith.constant 0 : index
    %c0_2 = arith.constant 0 : index
    %1 = vector.load %arg3[%c0_1, %c0_2] : memref<4x8xf32, #tpu.memory_space<vmem>>, vector<4x8xf32>
    %c0_3 = arith.constant 0 : index
    %c0_4 = arith.constant 0 : index
    %2 = vector.load %arg1[%c0_3, %c0_4] : memref<8x128xf32, #tpu.memory_space<vmem>>, vector<8x128xf32>
    %cst = arith.constant dense<0.000000e+00> : vector<4x128xf32>
    %3 = tpu.matmul %1, %2, %cst {dimension_numbers = #tpu.dot_dimension_numbers<[1], [0], [0], [1], [0, 0, 1, 1], [], []>, precision = #tpu.contract_precision<fp32>} : vector<4x8xf32>, vector<8x128xf32>, vector<4x128xf32> -> vector<4x128xf32>
    %4 = vector.broadcast %0 : vector<1x128xf32> to vector<4x128xf32>
    %5 = arith.addf %3, %4 : vector<4x128xf32>
    %6 = math.sin %5 : vector<4x128xf32>
    %c0_5 = arith.constant 0 : index
    %c0_6 = arith.constant 0 : index
    %7 = vector.load %arg4[%c0_5, %c0_6] : memref<4x128xf32, #tpu.memory_space<vmem>>, vector<4x128xf32>
    tpu.vector_store %arg4[%c0_5, %c0_6], %6 {strides = array<i32>} : memref<4x128xf32, #tpu.memory_space<vmem>>, vector<4x128xf32>,
    return
  }
  func.func @transform_0(%arg0: i32) -> (i32, i32) {
    %c0_i32 = arith.constant 0 : i32
    %c0_i32_0 = arith.constant 0 : i32
    %c0_i32_1 = arith.constant 0 : i32
    return %c0_i32, %c0_i32_0 : i32, i32
  }
  func.func @transform_1(%arg0: i32) -> (i32, i32) {
    %c0_i32 = arith.constant 0 : i32
    %c0_i32_0 = arith.constant 0 : i32
    %c0_i32_1 = arith.constant 0 : i32
    return %c0_i32, %c0_i32_0 : i32, i32
  }
  func.func @transform_2(%arg0: i32) -> (i32, i32) {
    %c0_i32 = arith.constant 0 : i32
    %c0_i32_0 = arith.constant 0 : i32
    return %arg0, %c0_i32 : i32, i32
  }
  func.func @transform_3(%arg0: i32) -> (i32, i32) {
    %c0_i32 = arith.constant 0 : i32
    %c0_i32_0 = arith.constant 0 : i32
    return %arg0, %c0_i32 : i32, i32
  }
}

</mosaic_0001>

<llo_original>
// kernel: tpu_custom_call.1
$region0: #{tpu_custom_call.1}
  #allocation0 [shape = 'u32[]', space=smem, size = 0x4, offset = 0x4, fixed_abs, tag = 'smem constant byte address 0x4 - core index']
  #allocation1 [shape = 'u32[144,128]{1,0:T(1,128)}', space=vmem, size = 0x12000, scoped, tag = 'internal scratch']
  %s0 = inlined_call_operand.hbm [shape: f32[8,128], index: 0, kind: input, shape index: {}]
  %s1 = inlined_call_operand.vmem [shape: f32[1,128], index: 1, kind: input, shape index: {}]
  %s2 = inlined_call_operand.vmem [shape: f32[4,8], index: 2, kind: input, shape index: {}]
  %s3 = inlined_call_operand.hbm [shape: f32[4,128], index: 3, kind: output, shape index: {}]
  %s4 = sld [smem:[#allocation0]]
  $region26: #{tpu_custom_call.1} parent=0
    _
  %s6 = ssub.s32 1, %s4
  %s7 = scalar_select 0, %s6, %s4
  $region1: #{tpu_custom_call.1} parent=0
    #allocation2 [shape = 'u8[4096]{0}', space=vmem, size = 0x1000, scoped, tag = 'input window, operand 0, single buffered']
    #allocation3 [shape = 's32[1]{0}', space=sflag, size = 0x4, scoped, tag = 'scoped memory for tpu_custom_call.1']
    #allocation4 [shape = 's32[1]{0}', space=sflag, size = 0x4, scoped, tag = 'scoped memory for tpu_custom_call.1']
    #allocation5 [shape = 'u8[2048]{0}', space=vmem, size = 0x800, scoped, tag = 'output window, operand 0, single buffered']
    %8 = vsyncpa [#allocation3], 0
    %9 = vsyncpa [#allocation4], 0
    // Predicated region
    $region2: #{tpu_custom_call.1} parent=1 // pred_check
      _
    $region3: #{tpu_custom_call.1} parent=1 // pred_check_branch
      %11 = sbr.rel (0) target = $region5
    $region4: #{tpu_custom_call.1} parent=1 // pred_region
      %s13 = ssub.s32 128, 128
      %14 = vsyncadd [#allocation3], %s13
      %s16 = sshll.u32 [#allocation2], 4
      %s17 = int_to_ptr.vmem [resolvable:$true] %s16
      %19 = dma.hbm_to_vmem [thread:$0]  %s0, 128, %s17, [#allocation3]
    $region5: #{tpu_custom_call.1} parent=1 // pred_fallthru
      _
    // Predicated region
    $region6: #{tpu_custom_call.1} parent=1 // pred_check
      _
    $region7: #{tpu_custom_call.1} parent=1 // pred_check_branch
      %21 = sbr.rel (0) target = $region9
    $region8: #{tpu_custom_call.1} parent=1 // pred_region
      _
    $region9: #{tpu_custom_call.1} parent=1 // pred_fallthru
      _
    // Predicated region
    $region10: #{tpu_custom_call.1} parent=1 // pred_check
      _
    $region11: #{tpu_custom_call.1} parent=1 // pred_check_branch
      %23 = sbr.rel (0) target = $region13
    $region12: #{tpu_custom_call.1} parent=1 // pred_region
      _
    $region13: #{tpu_custom_call.1} parent=1 // pred_fallthru
      _
    // Predicated region
    $region14: #{tpu_custom_call.1} parent=1 // pred_check
      _
    $region15: #{tpu_custom_call.1} parent=1 // pred_check_branch
      %25 = sbr.rel (0) target = $region17
    $region16: #{tpu_custom_call.1} parent=1 // pred_region
      %26 = dma.done [#allocation3], 128
    $region17: #{tpu_custom_call.1} parent=1 // pred_fallthru
      _
    %v27 = vld [vmem:[%s1] sm:$0x1]
    %v28 = vld [vmem:[%s2] sm:$0xf]
    %v29 = vld [vmem:[#allocation2] sm:$0xff]
    %v31 = vlaneseq
    %v32 = vshrl.u32 %v31, 7
    %v33 = vsub.s32 0, %v32
    %v34 = vrot.slane %v27, %v33
    %vm36 = vcmask 64512
    %v38 = vsel %vm36, %v28, 0
    %40 = vmatprep.subr.mxu0 0.0
    %v41 = vand.u32 %v29, 4294901760
    %42 = vmatpush1.msra.mxu0 %v41
    %43 = vmatprep.subr.mxu0 0.0
    %44 = vmatpush1.msra.mxu0 0.0
    %45 = vmatprep.subr.mxu0 0.0
    %46 = vmatpush1.msra.mxu0 0.0
    %47 = vmatprep.subr.mxu0 0.0
    %48 = vmatpush1.msra.mxu0 0.0
    %49 = vmatprep.subr.mxu0 0.0
    %50 = vmatpush1.msra.mxu0 0.0
    %51 = vmatprep.subr.mxu0 0.0
    %52 = vmatpush1.msra.mxu0 0.0
    %53 = vmatprep.subr.mxu0 0.0
    %54 = vmatpush1.msra.mxu0 0.0
    %55 = vmatprep.subr.mxu0 0.0
    %56 = vmatpush1.msra.mxu0 0.0
    %57 = vmatprep.subr.mxu0 0.0
    %58 = vmatpush1.msra.mxu0 0.0
    %59 = vmatprep.subr.mxu0 0.0
    %60 = vmatpush1.msra.mxu0 0.0
    %61 = vmatprep.subr.mxu0 0.0
    %62 = vmatpush1.msra.mxu0 0.0
    %63 = vmatprep.subr.mxu0 0.0
    %64 = vmatpush1.msra.mxu0 0.0
    %65 = vmatprep.subr.mxu0 0.0
    %66 = vmatpush1.msra.mxu0 0.0
    %67 = vmatprep.subr.mxu0 0.0
    %68 = vmatpush1.msra.mxu0 0.0
    %69 = vmatprep.subr.mxu0 0.0
    %70 = vmatpush1.msra.mxu0 0.0
    %71 = vmatprep.subr.mxu0 0.0
    %72 = vmatpush1.msra.mxu0 0.0
    %73 = vmatprep.subr.mxu0 0.0
    %74 = vmatpush1.msra.mxu0 0.0
    %75 = vmatprep.subr.mxu0 0.0
    %76 = vmatpush1.msra.mxu0 0.0
    %77 = vmatprep.subr.mxu0 0.0
    %78 = vmatpush1.msra.mxu0 0.0
    %79 = vmatprep.subr.mxu0 0.0
    %80 = vmatpush1.msra.mxu0 0.0
    %81 = vmatprep.subr.mxu0 0.0
    %82 = vmatpush1.msra.mxu0 0.0
    %83 = vmatprep.subr.mxu0 0.0
    %84 = vmatpush1.msra.mxu0 0.0
    %85 = vmatprep.subr.mxu0 0.0
    %86 = vmatpush1.msra.mxu0 0.0
    %87 = vmatprep.subr.mxu0 0.0
    %88 = vmatpush1.msra.mxu0 0.0
    %89 = vmatprep.subr.mxu0 0.0
    %90 = vmatpush1.msra.mxu0 0.0
    %91 = vmatprep.subr.mxu0 0.0
    %92 = vmatpush1.msra.mxu0 0.0
    %93 = vmatprep.subr.mxu0 0.0
    %94 = vmatpush1.msra.mxu0 0.0
    %95 = vmatprep.subr.mxu0 0.0
    %96 = vmatpush1.msra.mxu0 0.0
    %97 = vmatprep.subr.mxu0 0.0
    %98 = vmatpush1.msra.mxu0 0.0
    %99 = vmatprep.subr.mxu0 0.0
    %100 = vmatpush1.msra.mxu0 0.0
    %101 = vmatprep.subr.mxu0 0.0
    %102 = vmatpush1.msra.mxu0 0.0
    %103 = vmatprep.subr.mxu0 0.0
    %104 = vmatpush1.msra.mxu0 0.0
    %105 = vmatprep.mubr.f32.mxu0 0.0
    %v106 = vand.u32 %v38, 4294901760
    %v107 = vsub.f32 %v38, %v106
    %v108 = vand.u32 %v107, 4294901760
    %v109 = vsub.f32 %v107, %v108
    %v110 = vand.u32 %v109, 4294901760
    %111 = vmatmul.mubr.f32.gmra.mrb[0].mxu0 %v110
    %v112 = vpop.f32.mrb[0].mxu0
    %v113 = vadd.f32 %v34, %v112
    %v114 = vpop.f32.mrb[0].mxu0
    %115 = vdwg.mxu0
    %116 = vmatprep.subr.mxu0 0.0
    %v117 = vand.u32 %v29, 4294901760
    %v118 = vsub.f32 %v29, %v117
    %v119 = vand.u32 %v118, 4294901760
    %v120 = vsub.f32 %v118, %v119
    %v121 = vand.u32 %v120, 4294901760
    %122 = vmatpush1.msra.mxu0 %v121
    %123 = vmatprep.subr.mxu0 0.0
    %124 = vmatpush1.msra.mxu0 0.0
    %125 = vmatprep.subr.mxu0 0.0
    %126 = vmatpush1.msra.mxu0 0.0
    %127 = vmatprep.subr.mxu0 0.0
    %128 = vmatpush1.msra.mxu0 0.0
    %129 = vmatprep.subr.mxu0 0.0
    %130 = vmatpush1.msra.mxu0 0.0
    %131 = vmatprep.subr.mxu0 0.0
    %132 = vmatpush1.msra.mxu0 0.0
    %133 = vmatprep.subr.mxu0 0.0
    %134 = vmatpush1.msra.mxu0 0.0
    %135 = vmatprep.subr.mxu0 0.0
    %136 = vmatpush1.msra.mxu0 0.0
    %137 = vmatprep.subr.mxu0 0.0
    %138 = vmatpush1.msra.mxu0 0.0
    %139 = vmatprep.subr.mxu0 0.0
    %140 = vmatpush1.msra.mxu0 0.0
    %141 = vmatprep.subr.mxu0 0.0
    %142 = vmatpush1.msra.mxu0 0.0
    %143 = vmatprep.subr.mxu0 0.0
    %144 = vmatpush1.msra.mxu0 0.0
    %145 = vmatprep.subr.mxu0 0.0
    %146 = vmatpush1.msra.mxu0 0.0
    %147 = vmatprep.subr.mxu0 0.0
    %148 = vmatpush1.msra.mxu0 0.0
    %149 = vmatprep.subr.mxu0 0.0
    %150 = vmatpush1.msra.mxu0 0.0
    %151 = vmatprep.subr.mxu0 0.0
    %152 = vmatpush1.msra.mxu0 0.0
    %153 = vmatprep.subr.mxu0 0.0
    %154 = vmatpush1.msra.mxu0 0.0
    %155 = vmatprep.subr.mxu0 0.0
    %156 = vmatpush1.msra.mxu0 0.0
    %157 = vmatprep.subr.mxu0 0.0
    %158 = vmatpush1.msra.mxu0 0.0
    %159 = vmatprep.subr.mxu0 0.0
    %160 = vmatpush1.msra.mxu0 0.0
    %161 = vmatprep.subr.mxu0 0.0
    %162 = vmatpush1.msra.mxu0 0.0
    %163 = vmatprep.subr.mxu0 0.0
    %164 = vmatpush1.msra.mxu0 0.0
    %165 = vmatprep.subr.mxu0 0.0
    %166 = vmatpush1.msra.mxu0 0.0
    %167 = vmatprep.subr.mxu0 0.0
    %168 = vmatpush1.msra.mxu0 0.0
    %169 = vmatprep.subr.mxu0 0.0
    %170 = vmatpush1.msra.mxu0 0.0
    %171 = vmatprep.subr.mxu0 0.0
    %172 = vmatpush1.msra.mxu0 0.0
    %173 = vmatprep.subr.mxu0 0.0
    %174 = vmatpush1.msra.mxu0 0.0
    %175 = vmatprep.subr.mxu0 0.0
    %176 = vmatpush1.msra.mxu0 0.0
    %177 = vmatprep.subr.mxu0 0.0
    %178 = vmatpush1.msra.mxu0 0.0
    %179 = vmatprep.subr.mxu0 0.0
    %180 = vmatpush1.msra.mxu0 0.0
    %181 = vmatprep.subr.mxu0 0.0
    %182 = vmatpush1.msra.mxu0 0.0
    %183 = vmatprep.subr.mxu0 0.0
    %184 = vmatpush1.msra.mxu0 0.0
    %185 = vmatprep.mubr.f32.mxu0 0.0
    %v186 = vand.u32 %v38, 4294901760
    %187 = vmatmul.mubr.f32.gmra.mrb[0].mxu0 %v186
    %v188 = vpop.f32.mrb[0].mxu0
    %v189 = vadd.f32 %v113, %v188
    %v190 = vpop.f32.mrb[0].mxu0
    %191 = vdwg.mxu0
    %192 = vmatprep.subr.mxu0 0.0
    %v193 = vand.u32 %v29, 4294901760
    %v194 = vsub.f32 %v29, %v193
    %195 = vmatpush1.msra.mxu0 %v194
    %196 = vmatprep.subr.mxu0 0.0
    %197 = vmatpush1.msra.mxu0 0.0
    %198 = vmatprep.subr.mxu0 0.0
    %199 = vmatpush1.msra.mxu0 0.0
    %200 = vmatprep.subr.mxu0 0.0
    %201 = vmatpush1.msra.mxu0 0.0
    %202 = vmatprep.subr.mxu0 0.0
    %203 = vmatpush1.msra.mxu0 0.0
    %204 = vmatprep.subr.mxu0 0.0
    %205 = vmatpush1.msra.mxu0 0.0
    %206 = vmatprep.subr.mxu0 0.0
    %207 = vmatpush1.msra.mxu0 0.0
    %208 = vmatprep.subr.mxu0 0.0
    %209 = vmatpush1.msra.mxu0 0.0
    %210 = vmatprep.subr.mxu0 0.0
    %211 = vmatpush1.msra.mxu0 0.0
    %212 = vmatprep.subr.mxu0 0.0
    %213 = vmatpush1.msra.mxu0 0.0
    %214 = vmatprep.subr.mxu0 0.0
    %215 = vmatpush1.msra.mxu0 0.0
    %216 = vmatprep.subr.mxu0 0.0
    %217 = vmatpush1.msra.mxu0 0.0
    %218 = vmatprep.subr.mxu0 0.0
    %219 = vmatpush1.msra.mxu0 0.0
    %220 = vmatprep.subr.mxu0 0.0
    %221 = vmatpush1.msra.mxu0 0.0
    %222 = vmatprep.subr.mxu0 0.0
    %223 = vmatpush1.msra.mxu0 0.0
    %224 = vmatprep.subr.mxu0 0.0
    %225 = vmatpush1.msra.mxu0 0.0
    %226 = vmatprep.subr.mxu0 0.0
    %227 = vmatpush1.msra.mxu0 0.0
    %228 = vmatprep.subr.mxu0 0.0
    %229 = vmatpush1.msra.mxu0 0.0
    %230 = vmatprep.subr.mxu0 0.0
    %231 = vmatpush1.msra.mxu0 0.0
    %232 = vmatprep.subr.mxu0 0.0
    %233 = vmatpush1.msra.mxu0 0.0
    %234 = vmatprep.subr.mxu0 0.0
    %235 = vmatpush1.msra.mxu0 0.0
    %236 = vmatprep.subr.mxu0 0.0
    %237 = vmatpush1.msra.mxu0 0.0
    %238 = vmatprep.subr.mxu0 0.0
    %239 = vmatpush1.msra.mxu0 0.0
    %240 = vmatprep.subr.mxu0 0.0
    %241 = vmatpush1.msra.mxu0 0.0
    %242 = vmatprep.subr.mxu0 0.0
    %243 = vmatpush1.msra.mxu0 0.0
    %244 = vmatprep.subr.mxu0 0.0
    %245 = vmatpush1.msra.mxu0 0.0
    %246 = vmatprep.subr.mxu0 0.0
    %247 = vmatpush1.msra.mxu0 0.0
    %248 = vmatprep.subr.mxu0 0.0
    %249 = vmatpush1.msra.mxu0 0.0
    %250 = vmatprep.subr.mxu0 0.0
    %251 = vmatpush1.msra.mxu0 0.0
    %252 = vmatprep.subr.mxu0 0.0
    %253 = vmatpush1.msra.mxu0 0.0
    %254 = vmatprep.subr.mxu0 0.0
    %255 = vmatpush1.msra.mxu0 0.0
    %256 = vmatprep.subr.mxu0 0.0
    %257 = vmatpush1.msra.mxu0 0.0
    %258 = vmatprep.mubr.f32.mxu0 0.0
    %v259 = vand.u32 %v38, 4294901760
    %v260 = vsub.f32 %v38, %v259
    %261 = vmatmul.mubr.f32.gmra.mrb[0].mxu0 %v260
    %v262 = vpop.f32.mrb[0].mxu0
    %v263 = vadd.f32 %v189, %v262
    %v264 = vpop.f32.mrb[0].mxu0
    %265 = vdwg.mxu0
    %266 = vmatprep.subr.mxu0 0.0
    %v267 = vand.u32 %v29, 4294901760
    %268 = vmatpush1.msra.mxu0 %v267
    %269 = vmatprep.subr.mxu0 0.0
    %270 = vmatpush1.msra.mxu0 0.0
    %271 = vmatprep.subr.mxu0 0.0
    %272 = vmatpush1.msra.mxu0 0.0
    %273 = vmatprep.subr.mxu0 0.0
    %274 = vmatpush1.msra.mxu0 0.0
    %275 = vmatprep.subr.mxu0 0.0
    %276 = vmatpush1.msra.mxu0 0.0
    %277 = vmatprep.subr.mxu0 0.0
    %278 = vmatpush1.msra.mxu0 0.0
    %279 = vmatprep.subr.mxu0 0.0
    %280 = vmatpush1.msra.mxu0 0.0
    %281 = vmatprep.subr.mxu0 0.0
    %282 = vmatpush1.msra.mxu0 0.0
    %283 = vmatprep.subr.mxu0 0.0
    %284 = vmatpush1.msra.mxu0 0.0
    %285 = vmatprep.subr.mxu0 0.0
    %286 = vmatpush1.msra.mxu0 0.0
    %287 = vmatprep.subr.mxu0 0.0
    %288 = vmatpush1.msra.mxu0 0.0
    %289 = vmatprep.subr.mxu0 0.0
    %290 = vmatpush1.msra.mxu0 0.0
    %291 = vmatprep.subr.mxu0 0.0
    %292 = vmatpush1.msra.mxu0 0.0
    %293 = vmatprep.subr.mxu0 0.0
    %294 = vmatpush1.msra.mxu0 0.0
    %295 = vmatprep.subr.mxu0 0.0
    %296 = vmatpush1.msra.mxu0 0.0
    %297 = vmatprep.subr.mxu0 0.0
    %298 = vmatpush1.msra.mxu0 0.0
    %299 = vmatprep.subr.mxu0 0.0
    %300 = vmatpush1.msra.mxu0 0.0
    %301 = vmatprep.subr.mxu0 0.0
    %302 = vmatpush1.msra.mxu0 0.0
    %303 = vmatprep.subr.mxu0 0.0
    %304 = vmatpush1.msra.mxu0 0.0
    %305 = vmatprep.subr.mxu0 0.0
    %306 = vmatpush1.msra.mxu0 0.0
    %307 = vmatprep.subr.mxu0 0.0
    %308 = vmatpush1.msra.mxu0 0.0
    %309 = vmatprep.subr.mxu0 0.0
    %310 = vmatpush1.msra.mxu0 0.0
    %311 = vmatprep.subr.mxu0 0.0
    %312 = vmatpush1.msra.mxu0 0.0
    %313 = vmatprep.subr.mxu0 0.0
    %314 = vmatpush1.msra.mxu0 0.0
    %315 = vmatprep.subr.mxu0 0.0
    %316 = vmatpush1.msra.mxu0 0.0
    %317 = vmatprep.subr.mxu0 0.0
    %318 = vmatpush1.msra.mxu0 0.0
    %319 = vmatprep.subr.mxu0 0.0
    %320 = vmatpush1.msra.mxu0 0.0
    %321 = vmatprep.subr.mxu0 0.0
    %322 = vmatpush1.msra.mxu0 0.0
    %323 = vmatprep.subr.mxu0 0.0
    %324 = vmatpush1.msra.mxu0 0.0
    %325 = vmatprep.subr.mxu0 0.0
    %326 = vmatpush1.msra.mxu0 0.0
    %327 = vmatprep.subr.mxu0 0.0
    %328 = vmatpush1.msra.mxu0 0.0
    %329 = vmatprep.subr.mxu0 0.0
    %330 = vmatpush1.msra.mxu0 0.0
    %331 = vmatprep.mubr.f32.mxu0 0.0
    %v332 = vand.u32 %v38, 4294901760
    %v333 = vsub.f32 %v38, %v332
    %v334 = vand.u32 %v333, 4294901760
    %335 = vmatmul.mubr.f32.gmra.mrb[0].mxu0 %v334
    %v336 = vpop.f32.mrb[0].mxu0
    %v337 = vadd.f32 %v263, %v336
    %v338 = vpop.f32.mrb[0].mxu0
    %339 = vdwg.mxu0
    %340 = vmatprep.subr.mxu0 0.0
    %v341 = vand.u32 %v29, 4294901760
    %v342 = vsub.f32 %v29, %v341
    %v343 = vand.u32 %v342, 4294901760
    %344 = vmatpush1.msra.mxu0 %v343
    %345 = vmatprep.subr.mxu0 0.0
    %346 = vmatpush1.msra.mxu0 0.0
    %347 = vmatprep.subr.mxu0 0.0
    %348 = vmatpush1.msra.mxu0 0.0
    %349 = vmatprep.subr.mxu0 0.0
    %350 = vmatpush1.msra.mxu0 0.0
    %351 = vmatprep.subr.mxu0 0.0
    %352 = vmatpush1.msra.mxu0 0.0
    %353 = vmatprep.subr.mxu0 0.0
    %354 = vmatpush1.msra.mxu0 0.0
    %355 = vmatprep.subr.mxu0 0.0
    %356 = vmatpush1.msra.mxu0 0.0
    %357 = vmatprep.subr.mxu0 0.0
    %358 = vmatpush1.msra.mxu0 0.0
    %359 = vmatprep.subr.mxu0 0.0
    %360 = vmatpush1.msra.mxu0 0.0
    %361 = vmatprep.subr.mxu0 0.0
    %362 = vmatpush1.msra.mxu0 0.0
    %363 = vmatprep.subr.mxu0 0.0
    %364 = vmatpush1.msra.mxu0 0.0
    %365 = vmatprep.subr.mxu0 0.0
    %366 = vmatpush1.msra.mxu0 0.0
    %367 = vmatprep.subr.mxu0 0.0
    %368 = vmatpush1.msra.mxu0 0.0
    %369 = vmatprep.subr.mxu0 0.0
    %370 = vmatpush1.msra.mxu0 0.0
    %371 = vmatprep.subr.mxu0 0.0
    %372 = vmatpush1.msra.mxu0 0.0
    %373 = vmatprep.subr.mxu0 0.0
    %374 = vmatpush1.msra.mxu0 0.0
    %375 = vmatprep.subr.mxu0 0.0
    %376 = vmatpush1.msra.mxu0 0.0
    %377 = vmatprep.subr.mxu0 0.0
    %378 = vmatpush1.msra.mxu0 0.0
    %379 = vmatprep.subr.mxu0 0.0
    %380 = vmatpush1.msra.mxu0 0.0
    %381 = vmatprep.subr.mxu0 0.0
    %382 = vmatpush1.msra.mxu0 0.0
    %383 = vmatprep.subr.mxu0 0.0
    %384 = vmatpush1.msra.mxu0 0.0
    %385 = vmatprep.subr.mxu0 0.0
    %386 = vmatpush1.msra.mxu0 0.0
    %387 = vmatprep.subr.mxu0 0.0
    %388 = vmatpush1.msra.mxu0 0.0
    %389 = vmatprep.subr.mxu0 0.0
    %390 = vmatpush1.msra.mxu0 0.0
    %391 = vmatprep.subr.mxu0 0.0
    %392 = vmatpush1.msra.mxu0 0.0
    %393 = vmatprep.subr.mxu0 0.0
    %394 = vmatpush1.msra.mxu0 0.0
    %395 = vmatprep.subr.mxu0 0.0
    %396 = vmatpush1.msra.mxu0 0.0
    %397 = vmatprep.subr.mxu0 0.0
    %398 = vmatpush1.msra.mxu0 0.0
    %399 = vmatprep.subr.mxu0 0.0
    %400 = vmatpush1.msra.mxu0 0.0
    %401 = vmatprep.subr.mxu0 0.0
    %402 = vmatpush1.msra.mxu0 0.0
    %403 = vmatprep.subr.mxu0 0.0
    %404 = vmatpush1.msra.mxu0 0.0
    %405 = vmatprep.subr.mxu0 0.0
    %406 = vmatpush1.msra.mxu0 0.0
    %407 = vmatprep.mubr.f32.mxu0 0.0
    %v408 = vand.u32 %v38, 4294901760
    %409 = vmatmul.mubr.f32.gmra.mrb[0].mxu0 %v408
    %v410 = vpop.f32.mrb[0].mxu0
    %v411 = vadd.f32 %v337, %v410
    %v412 = vpop.f32.mrb[0].mxu0
    %413 = vdwg.mxu0
    %414 = vmatprep.subr.mxu0 0.0
    %v415 = vand.u32 %v29, 4294901760
    %416 = vmatpush1.msra.mxu0 %v415
    %417 = vmatprep.subr.mxu0 0.0
    %418 = vmatpush1.msra.mxu0 0.0
    %419 = vmatprep.subr.mxu0 0.0
    %420 = vmatpush1.msra.mxu0 0.0
    %421 = vmatprep.subr.mxu0 0.0
    %422 = vmatpush1.msra.mxu0 0.0
    %423 = vmatprep.subr.mxu0 0.0
    %424 = vmatpush1.msra.mxu0 0.0
    %425 = vmatprep.subr.mxu0 0.0
    %426 = vmatpush1.msra.mxu0 0.0
    %427 = vmatprep.subr.mxu0 0.0
    %428 = vmatpush1.msra.mxu0 0.0
    %429 = vmatprep.subr.mxu0 0.0
    %430 = vmatpush1.msra.mxu0 0.0
    %431 = vmatprep.subr.mxu0 0.0
    %432 = vmatpush1.msra.mxu0 0.0
    %433 = vmatprep.subr.mxu0 0.0
    %434 = vmatpush1.msra.mxu0 0.0
    %435 = vmatprep.subr.mxu0 0.0
    %436 = vmatpush1.msra.mxu0 0.0
    %437 = vmatprep.subr.mxu0 0.0
    %438 = vmatpush1.msra.mxu0 0.0
    %439 = vmatprep.subr.mxu0 0.0
    %440 = vmatpush1.msra.mxu0 0.0
    %441 = vmatprep.subr.mxu0 0.0
    %442 = vmatpush1.msra.mxu0 0.0
    %443 = vmatprep.subr.mxu0 0.0
    %444 = vmatpush1.msra.mxu0 0.0
    %445 = vmatprep.subr.mxu0 0.0
    %446 = vmatpush1.msra.mxu0 0.0
    %447 = vmatprep.subr.mxu0 0.0
    %448 = vmatpush1.msra.mxu0 0.0
    %449 = vmatprep.subr.mxu0 0.0
    %450 = vmatpush1.msra.mxu0 0.0
    %451 = vmatprep.subr.mxu0 0.0
    %452 = vmatpush1.msra.mxu0 0.0
    %453 = vmatprep.subr.mxu0 0.0
    %454 = vmatpush1.msra.mxu0 0.0
    %455 = vmatprep.subr.mxu0 0.0
    %456 = vmatpush1.msra.mxu0 0.0
    %457 = vmatprep.subr.mxu0 0.0
    %458 = vmatpush1.msra.mxu0 0.0
    %459 = vmatprep.subr.mxu0 0.0
    %460 = vmatpush1.msra.mxu0 0.0
    %461 = vmatprep.subr.mxu0 0.0
    %462 = vmatpush1.msra.mxu0 0.0
    %463 = vmatprep.subr.mxu0 0.0
    %464 = vmatpush1.msra.mxu0 0.0
    %465 = vmatprep.subr.mxu0 0.0
    %466 = vmatpush1.msra.mxu0 0.0
    %467 = vmatprep.subr.mxu0 0.0
    %468 = vmatpush1.msra.mxu0 0.0
    %469 = vmatprep.subr.mxu0 0.0
    %470 = vmatpush1.msra.mxu0 0.0
    %471 = vmatprep.subr.mxu0 0.0
    %472 = vmatpush1.msra.mxu0 0.0
    %473 = vmatprep.subr.mxu0 0.0
    %474 = vmatpush1.msra.mxu0 0.0
    %475 = vmatprep.subr.mxu0 0.0
    %476 = vmatpush1.msra.mxu0 0.0
    %477 = vmatprep.subr.mxu0 0.0
    %478 = vmatpush1.msra.mxu0 0.0
    %479 = vmatprep.mubr.f32.mxu0 0.0
    %v480 = vand.u32 %v38, 4294901760
    %481 = vmatmul.mubr.f32.gmra.mrb[0].mxu0 %v480
    %v482 = vpop.f32.mrb[0].mxu0
    %v483 = vadd.f32 %v411, %v482
    %v484 = vpop.f32.mrb[0].mxu0
    %485 = vdwg.mxu0
    %v486 = vand.u32 2147483647, %v483
    %vm487 = vcmp.le.f32.partialorder %v486, 0.7853982
    %vm488 = vcmp.lt.s32.totalorder %v483, 0
    %v489 = vand.u32 %v483, 2139095040
    %v490 = vshrl.u32 %v489, 23
    %v491 = vsub.s32 %v490, 127
    %v492 = vand.u32 2147483647, %v483
    %v493 = vand.u32 %v492, 8388607
    %v494 = vor.u32 %v493, 8388608
    %v495 = vsub.s32 0, %v494
    %v496 = vadd.s32 %v491, 1
    %vm497 = vcmp.gt.s32.totalorder %v496, 0
    %v498 = vsel %vm497, %v496, 0
    %v499 = vshrl.u32 %v498, 5
    %v500 = vand.u32 %v498, 31
    %v501 = vsub.s32 32, %v500
    %v502 = vshrl.u32 683565275, %v501
    %v503 = vshll.u32 683565275, %v500
    %v504 = vshrl.u32 2475754826, %v501
    %v505 = vor.u32 %v503, %v504
    %v506 = vshll.u32 2475754826, %v500
    %v507 = vshrl.u32 2131351028, %v501
    %v508 = vor.u32 %v506, %v507
    %v509 = vshll.u32 2131351028, %v500
    %v510 = vshrl.u32 2102212464, %v501
    %v511 = vor.u32 %v509, %v510
    %v512 = vshll.u32 2102212464, %v500
    %v513 = vshrl.u32 920167782, %v501
    %v514 = vor.u32 %v512, %v513
    %v515 = vshll.u32 920167782, %v500
    %v516 = vshrl.u32 1326507024, %v501
    %v517 = vor.u32 %v515, %v516
    %vm518 = vcmp.lt.s32.totalorder %v499, 1
    %vm519 = vcmp.lt.s32.totalorder %v499, 2
    %vm520 = vcmp.lt.s32.totalorder %v499, 3
    %vm521 = vcmp.lt.s32.totalorder %v499, 4
    %v522 = vsel %vm518, %v502, %v505
    %v523 = vsel %vm521, %v511, 2102212464
    %v524 = vsel %vm520, %v508, %v523
    %v525 = vsel %vm519, %v522, %v524
    %v526 = vsel %vm518, %v505, %v508
    %v527 = vsel %vm521, %v514, 920167782
    %v528 = vsel %vm520, %v511, %v527
    %v529 = vsel %vm519, %v526, %v528
    %v530 = vsel %vm518, %v508, %v511
    %v531 = vsel %vm521, %v517, 1326507024
    %v532 = vsel %vm520, %v514, %v531
    %v533 = vsel %vm519, %v530, %v532
    %v534 = vshll.u32 %v494, 8
    %v535 = vmul.u32.u64.compose %v534, %v533
    %v536 = vextract.low.u32 %v535
    %v537 = vextract.high.u32 %v535
    %v538 = vmul.u32.u64.compose %v534, %v529
    %v539 = vextract.low.u32 %v538
    %v540 = vextract.high.u32 %v538
    %v541 = vmul.u32 %v534, %v525
    %v542 = vadd.s32 %v537, %v539
    %vm543 = vc.u32 %v537, %v539
    %v544 = vadd.s32 %v540, 1
    %v545 = vsel %vm543, %v544, %v540
    %v546 = vadd.s32 %v541, %v545
    %v547 = vadd.s32 %v546, 536870912
    %v548 = vshrl.u32 %v547, 30
    %v549 = vshll.u32 %v548, 30
    %v550 = vsub.s32 %v546, %v549
    %vm551 = vcmp.lt.s32.totalorder %v550, 0
    %v552 = vsub.s32 0, %v550
    %v553 = vsel %vm551, %v552, %v550
    %v554 = vclz %v553
    %v555 = vsub.s32 %v554, 2
    %vm556 = vcmp.gt.s32.totalorder 0, %v555
    %v557 = vsel %vm556, 0, %v555
    %v558 = vsub.s32 32, %v557
    %v559 = vshll.u32 %v550, %v557
    %v560 = vshrl.u32 %v542, %v558
    %v561 = vor.u32 %v559, %v560
    %v562 = vsub.s32 4294967266, %v557
    %v563 = vadd.s32 %v562, 127
    %v564 = vshll.u32 %v563, 23
    %v565 = vor.u32 4788187, %v564
    %v566 = vand.u32 2147483647, %v565
    %v568 = vcvt.s32.f32 %v561
    %v569 = vmul.f32 %v568, %v566
    %v570 = vxor.u32 %v569, 2147483648
    %v571 = vsel %vm488, %v570, %v569
    %v572 = vsub.s32 4, %v548
    %v573 = vsel %vm488, %v572, %v548
    %v574 = vsel %vm487, %v483, %v571
    %v575 = vsel %vm487, 0, %v573
    %v576 = vcosq.f32.pop %v574
    %v577 = vsinq.f32.pop %v574
    %vm578 = vweird.f32 %v483
    %v579 = vadd.s32 %v575, 3
    %v580 = vand.u32 %v579, 3
    %vm581 = vcmp.lt.s32.totalorder %v580, 2
    %vm582 = vcmp.eq.s32.totalorder %v580, 0
    %v583 = vxor.u32 %v577, 2147483648
    %v584 = vsel %vm582, %v576, %v583
    %vm585 = vcmp.eq.s32.totalorder %v580, 2
    %v586 = vxor.u32 %v576, 2147483648
    %v587 = vsel %vm585, %v586, %v577
    %v588 = vsel %vm581, %v584, %v587
    %v589 = vsel %vm578, nan, %v588
    %590 = vst [vmem:[#allocation5] sm:$0xf] %v589
    // Predicated region
    $region18: #{tpu_custom_call.1} parent=1 // pred_check
      _
    $region19: #{tpu_custom_call.1} parent=1 // pred_check_branch
      %592 = sbr.rel (0) target = $region21
    $region20: #{tpu_custom_call.1} parent=1 // pred_region
      %s594 = ssub.s32 64, 64
      %595 = vsyncadd [#allocation4], %s594
      %s597 = sshll.u32 [#allocation5], 4
      %s598 = int_to_ptr.vmem [resolvable:$true] %s597
      %600 = dma.vmem_to_hbm [thread:$0]  %s598, 64, %s3, [#allocation4]
    $region21: #{tpu_custom_call.1} parent=1 // pred_fallthru
      _
    // Predicated region
    $region22: #{tpu_custom_call.1} parent=1 // pred_check
      _
    $region23: #{tpu_custom_call.1} parent=1 // pred_check_branch
      %602 = sbr.rel (0) target = $region25
    $region24: #{tpu_custom_call.1} parent=1 // pred_region
      %603 = dma.done [#allocation4], 64
    $region25: #{tpu_custom_call.1} parent=1 // pred_fallthru
      _
    %604 = vsyncpa [#allocation3], 1
    %605 = vsyncpa [#allocation4], 1

</llo_original>
